<compile_context>
chip_gen: v7x
topology: tpu7x:2x2x1
jax: 0.10.0
libtpu: 0.0.40
codegen_flags: <defaults>
</compile_context>

<pallas_src>
import functools
import math

import jax
import jax.numpy as jnp
from jax.experimental import pallas as pl
from jax.experimental.pallas import tpu as pltpu


# ----------------------------- helpers -----------------------------

def _round_up(x, m):
    return (x + m - 1) // m * m


def _pad2d(a, rows, cols, dtype):
    a = a.astype(dtype)
    if a.shape == (rows, cols):
        return a
    return jnp.pad(a, ((0, rows - a.shape[0]), (0, cols - a.shape[1])))


def _pad_seq(a, t_pad, dtype):
    a = a.astype(dtype)
    if a.shape[1] == t_pad:
        return a
    return jnp.pad(a, ((0, 0), (0, t_pad - a.shape[1]), (0, 0)))


# ----------------------------- Pallas kernels -----------------------------

def _matmul_bias_kernel(x_ref, w_ref, b_ref, o_ref, acc_ref):
    """One (tm, tn) output tile; grid axis 2 is the K reduction (resident accumulator)."""
    @pl.when(pl.program_id(2) == 0)
    def _():
        acc_ref[...] = jnp.zeros_like(acc_ref)

    acc_ref[...] += jnp.dot(
        x_ref[...], w_ref[...], preferred_element_type=jnp.float32
    )

    @pl.when(pl.program_id(2) == pl.num_programs(2) - 1)
    def _():
        o_ref[...] = (acc_ref[...] + b_ref[...]).astype(o_ref.dtype)


def _attn_kernel(q_ref, k_ref, v_ref, o_ref, p_ref, *, scaling, valid_len, padded_len):
    """scores -> f32 softmax -> probs @ V for one (head, query-tile) grid point."""
    q = q_ref[0] * scaling                # (tq, Dh) in compute dtype (mirrors q *= scaling)
    k = k_ref[0]                          # (T_pad, Dh)
    v = v_ref[0]                          # (T_pad, Dh)

    # q @ k^T without materializing a transpose: contract the last axis of both.
    s = jax.lax.dot_general(
        q, k, (((1,), (1,)), ((), ())), preferred_element_type=jnp.float32
    )                                     # (tq, T_pad) f32

    if valid_len != padded_len:           # mask padded key columns (static branch)
        col = jax.lax.broadcasted_iota(jnp.int32, s.shape, 1)
        s = jnp.where(col < valid_len, s, -jnp.inf)

    s = s - jnp.max(s, axis=-1, keepdims=True)
    e = jnp.exp(s)
    p = e / jnp.sum(e, axis=-1, keepdims=True)        # f32 softmax (torch dtype=f32)

    p_ref[0] = p.astype(p_ref.dtype)
    # dropout_module is identity at inference.
    o_ref[0] = jnp.dot(
        p.astype(v.dtype), v, preferred_element_type=jnp.float32
    ).astype(o_ref.dtype)


# ----------------------------- wrappers -----------------------------

def linear_pallas(x, w_t, b, *, compute_dtype=None, tm=256, tn=512, tk=512):
    """y = x @ w_t + b  with x:(M,K), w_t:(K,N) pre-transposed, b:(N,)."""
    M, K = x.shape
    N = w_t.shape[1]
    out_dtype = x.dtype
    cdt = jnp.dtype(compute_dtype) if compute_dtype is not None else x.dtype

    # Tile sizes clamped to the (padded) problem; padding keeps every block
    # (8,128)-aligned and the output slab lane-dense.
    tm = min(tm, _round_up(M, 8))
    tk = min(tk, _round_up(K, 128))
    tn = min(tn, _round_up(N, 128))
    Mp, Kp, Np = _round_up(M, tm), _round_up(K, tk), _round_up(N, tn)

    xp = _pad2d(x, Mp, Kp, cdt)
    wp = _pad2d(w_t, Kp, Np, cdt)
    bp = _pad2d(b.reshape(1, -1), 1, Np, jnp.float32)

    grid = (Mp // tm, Np // tn, Kp // tk)
    cost = pl.CostEstimate(
        flops=2 * Mp * Np * Kp,
        transcendentals=0,
        bytes_accessed=(Mp * Kp + Kp * Np) * jnp.dtype(cdt).itemsize
        + Mp * Np * jnp.dtype(out_dtype).itemsize,
    )

    out = pl.pallas_call(
        _matmul_bias_kernel,
        out_shape=jax.ShapeDtypeStruct((Mp, Np), out_dtype),
        grid_spec=pltpu.PrefetchScalarGridSpec(
            num_scalar_prefetch=0,
            grid=grid,
            in_specs=[
                pl.BlockSpec((tm, tk), lambda i, j, k: (i, k)),
                pl.BlockSpec((tk, tn), lambda i, j, k: (k, j)),
                pl.BlockSpec((1, tn), lambda i, j, k: (0, j)),
            ],
            out_specs=pl.BlockSpec((tm, tn), lambda i, j, k: (i, j)),
            scratch_shapes=[pltpu.VMEM((tm, tn), jnp.float32)],
        ),
        compiler_params=pltpu.CompilerParams(
            dimension_semantics=("parallel", "parallel", "arbitrary")
        ),
        cost_estimate=cost,
    )(xp, wp, bp)
    return out[:M, :N]


def attention_pallas(q, k, v, scaling, *, compute_dtype=None, tq=128):
    """q,k,v: (B*H, T, Dh).  Returns (attn (B*H,T,Dh) in q.dtype, probs (B*H,T,T) f32)."""
    BH, T, Dh = q.shape
    out_dtype = q.dtype
    cdt = jnp.dtype(compute_dtype) if compute_dtype is not None else q.dtype

    tq = min(tq, _round_up(T, 8))
    T_pad = _round_up(T, tq)

    qp = _pad_seq(q, T_pad, cdt)
    kp = _pad_seq(k, T_pad, cdt)
    vp = _pad_seq(v, T_pad, cdt)

    kernel = functools.partial(
        _attn_kernel, scaling=float(scaling), valid_len=T, padded_len=T_pad
    )
    cost = pl.CostEstimate(
        flops=4 * BH * T_pad * T_pad * Dh,
        transcendentals=BH * T_pad * T_pad,
        bytes_accessed=3 * BH * T_pad * Dh * jnp.dtype(cdt).itemsize
        + BH * T_pad * T_pad * 4,
    )

    attn, probs = pl.pallas_call(
        kernel,
        out_shape=(
            jax.ShapeDtypeStruct((BH, T_pad, Dh), out_dtype),
            jax.ShapeDtypeStruct((BH, T_pad, T_pad), jnp.float32),
        ),
        grid_spec=pltpu.PrefetchScalarGridSpec(
            num_scalar_prefetch=0,
            grid=(BH, T_pad // tq),
            in_specs=[
                pl.BlockSpec((1, tq, Dh), lambda h, i: (h, i, 0)),
                pl.BlockSpec((1, T_pad, Dh), lambda h, i: (h, 0, 0)),
                pl.BlockSpec((1, T_pad, Dh), lambda h, i: (h, 0, 0)),
            ],
            out_specs=[
                pl.BlockSpec((1, tq, Dh), lambda h, i: (h, i, 0)),
                pl.BlockSpec((1, tq, T_pad), lambda h, i: (h, i, 0)),
            ],
        ),
        compiler_params=pltpu.CompilerParams(
            dimension_semantics=("parallel", "parallel")
        ),
        cost_estimate=cost,
    )(qp, kp, vp)
    return attn[:, :T, :], probs[:, :T, :T]


# ----------------------------- module forward -----------------------------

@functools.partial(
    jax.jit, static_argnames=("num_heads", "compute_dtype", "need_weights")
)
def self_mha_forward(query, params, *, num_heads, compute_dtype=jnp.float32,
                     need_weights=True):
    """
    query: (T, B, E) — Time x Batch x Channel, like the torch module.
    Returns (attn (T, B, E), attn_weights (B, T, T) averaged over heads or None).
    Default call path: key_padding_mask/attn_mask/attn_bias = None, eval mode.
    """
    # TODO(synk): key_padding_mask / attn_mask / attn_bias / before_softmax /
    #             need_head_weights branches are not implemented (default-None path only).
    T, B, E = query.shape
    H = num_heads
    Dh = E // H
    scaling = Dh ** -0.5

    x = query.reshape(T * B, E)

    # Fused QKV projection: weights pre-transposed host-side to (E, 3E).
    w_qkv_t = jnp.concatenate(
        [params["q_w"].T, params["k_w"].T, params["v_w"].T], axis=1
    )
    b_qkv = jnp.concatenate([params["q_b"], params["k_b"], params["v_b"]])
    qkv = linear_pallas(x, w_qkv_t, b_qkv, compute_dtype=compute_dtype)  # (T*B, 3E)
    q, k, v = jnp.split(qkv, 3, axis=1)

    def to_heads(a):  # (T*B, E) -> (B*H, T, Dh), matching torch's view/transpose
        return a.reshape(T, B, H, Dh).transpose(1, 2, 0, 3).reshape(B * H, T, Dh)

    qh, kh, vh = to_heads(q), to_heads(k), to_heads(v)

    attn_h, probs = attention_pallas(qh, kh, vh, scaling, compute_dtype=compute_dtype)

    # (B*H, T, Dh) -> (T, B, E), then output projection.
    attn = attn_h.reshape(B, H, T, Dh).transpose(2, 0, 1, 3).reshape(T * B, E)
    out = linear_pallas(
        attn, params["out_w"].T, params["out_b"], compute_dtype=compute_dtype
    ).reshape(T, B, E)

    attn_weights = None
    if need_weights:
        # torch: view(B,H,T,S).transpose(1,0).mean(dim=0)  ==  mean over heads
        attn_weights = probs.reshape(B, H, T, T).mean(axis=1)
    return out, attn_weights


# ----------------------------- params & reference -----------------------------

def _xavier_uniform(key, shape, gain=1.0):
    fan_out, fan_in = shape
    bound = gain * math.sqrt(6.0 / (fan_in + fan_out))
    return jax.random.uniform(key, shape, jnp.float32, -bound, bound)


def make_params(key, embed_dim):
    ks = jax.random.split(key, 8)
    g = 1.0 / math.sqrt(2.0)
    return {
        "q_w": _xavier_uniform(ks[0], (embed_dim, embed_dim), g),
        "q_b": 0.02 * jax.random.normal(ks[1], (embed_dim,), jnp.float32),
        "k_w": _xavier_uniform(ks[2], (embed_dim, embed_dim), g),
        "k_b": 0.02 * jax.random.normal(ks[3], (embed_dim,), jnp.float32),
        "v_w": _xavier_uniform(ks[4], (embed_dim, embed_dim), g),
        "v_b": 0.02 * jax.random.normal(ks[5], (embed_dim,), jnp.float32),
        "out_w": _xavier_uniform(ks[6], (embed_dim, embed_dim)),
        "out_b": jnp.zeros((embed_dim,), jnp.float32),  # torch: constant_(0.0)
    }


def reference_forward(query, params, num_heads):
    """Pure-JAX f32 mirror of the torch module (eval mode, default args)."""
    T, B, E = query.shape
    H = num_heads
    Dh = E // H
    scaling = Dh ** -0.5
    x = query.reshape(T * B, E)
    q = (x @ params["q_w"].T + params["q_b"]) * scaling
    k = x @ params["k_w"].T + params["k_b"]
    v = x @ params["v_w"].T + params["v_b"]

    def to_heads(a):
        return a.reshape(T, B, H, Dh).transpose(1, 2, 0, 3).reshape(B * H, T, Dh)

    qh, kh, vh = to_heads(q), to_heads(k), to_heads(v)
    s = jnp.einsum("bqd,bkd->bqk", qh, kh)
    p = jax.nn.softmax(s.astype(jnp.float32), axis=-1)
    attn = jnp.einsum("bqk,bkd->bqd", p, vh)
    attn = attn.reshape(B, H, T, Dh).transpose(2, 0, 1, 3).reshape(T * B, E)
    out = (attn @ params["out_w"].T + params["out_b"]).reshape(T, B, E)
    attn_w = p.reshape(B, H, T, T).mean(axis=1)
    return out, attn_w


# ----------------------------- test -----------------------------

if __name__ == "__main__":
    key = jax.random.PRNGKey(0)
    k_param, k_query = jax.random.split(key)

    T, B, E, H = 8, 2, 32, 4
    params = make_params(k_param, E)
    query = jax.random.normal(k_query, (T, B, E), dtype=jnp.float32)

    # f32 compute path
    out, attn_w = self_mha_forward(query, params, num_heads=H)
    jax.block_until_ready(out)
    jax.block_until_ready(attn_w)

    ref_out, ref_w = reference_forward(query, params, H)
    assert out.shape == (T, B, E) and attn_w.shape == (B, T, T)
    assert jnp.allclose(out, ref_out, atol=5e-3, rtol=5e-3), "output mismatch (f32)"
    assert jnp.allclose(attn_w, ref_w, atol=5e-3, rtol=5e-3), "attn weights mismatch (f32)"

    # bf16 compute path (production config: bf16 operands, f32 accumulation)
    out_bf16, attn_w_bf16 = self_mha_forward(
        query, params, num_heads=H, compute_dtype=jnp.bfloat16
    )
    jax.block_until_ready(out_bf16)
    assert jnp.allclose(out_bf16, ref_out, atol=1e-1, rtol=1e-1), "output mismatch (bf16)"
    assert jnp.allclose(attn_w_bf16, ref_w, atol=1e-1, rtol=1e-1), "attn weights mismatch (bf16)"

    print("KERNEL_OK")
</pallas_src>

<mosaic_0001>
module attributes {stable_mosaic.version = 11 : i64} {
  func.func @_attn_kernel(%arg0: i32, %arg1: i32, %arg2: memref<1x8x8xf32, #tpu.memory_space<vmem>>, %arg3: memref<1x8x8xf32, #tpu.memory_space<vmem>>, %arg4: memref<1x8x8xf32, #tpu.memory_space<vmem>>, %arg5: memref<1x8x8xf32, #tpu.memory_space<vmem>>, %arg6: memref<1x8x8xf32, #tpu.memory_space<vmem>>) attributes {dimension_semantics = [#tpu.dimension_semantics<parallel>, #tpu.dimension_semantics<parallel>], iteration_bounds = array<i64: 8, 1>, scalar_prefetch = 0 : i64, scratch_operands = 0 : i64, tpu.core_type = #tpu.core_type<tc>, window_params = [{transform_indices = @transform_0, window_bounds = array<i64: 1, 8, 8>}, {transform_indices = @transform_1, window_bounds = array<i64: 1, 8, 8>}, {transform_indices = @transform_2, window_bounds = array<i64: 1, 8, 8>}, {transform_indices = @transform_3, window_bounds = array<i64: 1, 8, 8>}, {transform_indices = @transform_4, window_bounds = array<i64: 1, 8, 8>}]} {
    %c0 = arith.constant 0 : index
    %c0_0 = arith.constant 0 : index
    %c0_1 = arith.constant 0 : index
    %0 = vector.load %arg2[%c0, %c0_0, %c0_1] : memref<1x8x8xf32, #tpu.memory_space<vmem>>, vector<1x8x8xf32>
    %1 = vector.shape_cast %0 : vector<1x8x8xf32> to vector<8x8xf32>
    %cst = arith.constant 0.353553385 : f32
    %2 = vector.broadcast %cst : f32 to vector<8x8xf32>
    %3 = arith.mulf %1, %2 : vector<8x8xf32>
    %c0_2 = arith.constant 0 : index
    %c0_3 = arith.constant 0 : index
    %c0_4 = arith.constant 0 : index
    %4 = vector.load %arg3[%c0_2, %c0_3, %c0_4] : memref<1x8x8xf32, #tpu.memory_space<vmem>>, vector<1x8x8xf32>
    %5 = vector.shape_cast %4 : vector<1x8x8xf32> to vector<8x8xf32>
    %c0_5 = arith.constant 0 : index
    %c0_6 = arith.constant 0 : index
    %c0_7 = arith.constant 0 : index
    %6 = vector.load %arg4[%c0_5, %c0_6, %c0_7] : memref<1x8x8xf32, #tpu.memory_space<vmem>>, vector<1x8x8xf32>
    %7 = vector.shape_cast %6 : vector<1x8x8xf32> to vector<8x8xf32>
    %cst_8 = arith.constant dense<0.000000e+00> : vector<8x8xf32>
    %8 = tpu.matmul %3, %5, %cst_8 {dimension_numbers = #tpu.dot_dimension_numbers<[1], [1], [0], [0], [0, 0, 1, 0], [], []>} : vector<8x8xf32>, vector<8x8xf32>, vector<8x8xf32> -> vector<8x8xf32>
    %cst_9 = arith.constant dense<0xFF800000> : vector<8xf32>
    %9 = vector.multi_reduction <maximumf>, %8, %cst_9 [1] : vector<8x8xf32> to vector<8xf32>
    %10 = vector.shape_cast %9 : vector<8xf32> to vector<8x1xf32>
    %11 = vector.broadcast %10 : vector<8x1xf32> to vector<8x8xf32>
    %12 = arith.subf %8, %11 : vector<8x8xf32>
    %13 = math.exp %12 : vector<8x8xf32>
    %cst_10 = arith.constant dense<0.000000e+00> : vector<8xf32>
    %14 = vector.multi_reduction <add>, %13, %cst_10 [1] : vector<8x8xf32> to vector<8xf32>
    %15 = vector.shape_cast %14 : vector<8xf32> to vector<8x1xf32>
    %16 = vector.broadcast %15 : vector<8x1xf32> to vector<8x8xf32>
    %17 = arith.divf %13, %16 : vector<8x8xf32>
    %c0_11 = arith.constant 0 : index
    %c0_12 = arith.constant 0 : index
    %c0_13 = arith.constant 0 : index
    %18 = vector.load %arg6[%c0_11, %c0_12, %c0_13] : memref<1x8x8xf32, #tpu.memory_space<vmem>>, vector<1x8x8xf32>
    %19 = vector.shape_cast %18 : vector<1x8x8xf32> to vector<8x8xf32>
    %20 = vector.shape_cast %17 : vector<8x8xf32> to vector<1x8x8xf32>
    tpu.vector_store %arg6[%c0_11, %c0_12, %c0_13], %20 {strides = array<i32>} : memref<1x8x8xf32, #tpu.memory_space<vmem>>, vector<1x8x8xf32>,
    %cst_14 = arith.constant dense<0.000000e+00> : vector<8x8xf32>
    %21 = tpu.matmul %17, %7, %cst_14 {dimension_numbers = #tpu.dot_dimension_numbers<[1], [0], [0], [1], [0, 0, 1, 1], [], []>} : vector<8x8xf32>, vector<8x8xf32>, vector<8x8xf32> -> vector<8x8xf32>
    %c0_15 = arith.constant 0 : index
    %c0_16 = arith.constant 0 : index
    %c0_17 = arith.constant 0 : index
    %22 = vector.load %arg5[%c0_15, %c0_16, %c0_17] : memref<1x8x8xf32, #tpu.memory_space<vmem>>, vector<1x8x8xf32>
    %23 = vector.shape_cast %22 : vector<1x8x8xf32> to vector<8x8xf32>
    %24 = vector.shape_cast %21 : vector<8x8xf32> to vector<1x8x8xf32>
    tpu.vector_store %arg5[%c0_15, %c0_16, %c0_17], %24 {strides = array<i32>} : memref<1x8x8xf32, #tpu.memory_space<vmem>>, vector<1x8x8xf32>,
    return
  }
  func.func @transform_0(%arg0: i32, %arg1: i32) -> (i32, i32, i32) {
    %c0_i32 = arith.constant 0 : i32
    %c0_i32_0 = arith.constant 0 : i32
    return %arg0, %arg1, %c0_i32 : i32, i32, i32
  }
  func.func @transform_1(%arg0: i32, %arg1: i32) -> (i32, i32, i32) {
    %c0_i32 = arith.constant 0 : i32
    %c0_i32_0 = arith.constant 0 : i32
    %c0_i32_1 = arith.constant 0 : i32
    return %arg0, %c0_i32, %c0_i32_0 : i32, i32, i32
  }
  func.func @transform_2(%arg0: i32, %arg1: i32) -> (i32, i32, i32) {
    %c0_i32 = arith.constant 0 : i32
    %c0_i32_0 = arith.constant 0 : i32
    %c0_i32_1 = arith.constant 0 : i32
    return %arg0, %c0_i32, %c0_i32_0 : i32, i32, i32
  }
  func.func @transform_3(%arg0: i32, %arg1: i32) -> (i32, i32, i32) {
    %c0_i32 = arith.constant 0 : i32
    %c0_i32_0 = arith.constant 0 : i32
    return %arg0, %arg1, %c0_i32 : i32, i32, i32
  }
  func.func @transform_4(%arg0: i32, %arg1: i32) -> (i32, i32, i32) {
    %c0_i32 = arith.constant 0 : i32
    %c0_i32_0 = arith.constant 0 : i32
    return %arg0, %arg1, %c0_i32 : i32, i32, i32
  }
}

module attributes {stable_mosaic.version = 11 : i64} {
  func.func @_matmul_bias_kernel(%arg0: i32, %arg1: i32, %arg2: i32, %arg3: memref<16x128xf32, #tpu.memory_space<vmem>>, %arg4: memref<128x128xf32, #tpu.memory_space<vmem>>, %arg5: memref<1x128xf32, #tpu.memory_space<vmem>>, %arg6: memref<16x128xf32, #tpu.memory_space<vmem>>, %arg7: memref<16x128xf32, #tpu.memory_space<vmem>>) attributes {dimension_semantics = [#tpu.dimension_semantics<parallel>, #tpu.dimension_semantics<parallel>, #tpu.dimension_semantics<arbitrary>], iteration_bounds = array<i64: 1, 1, 1>, scalar_prefetch = 0 : i64, scratch_operands = 1 : i64, tpu.core_type = #tpu.core_type<tc>, window_params = [{transform_indices = @transform_0, window_bounds = array<i64: 16, 128>}, {transform_indices = @transform_1, window_bounds = array<i64: 128, 128>}, {transform_indices = @transform_2, window_bounds = array<i64: 1, 128>}, {transform_indices = @transform_3, window_bounds = array<i64: 16, 128>}]} {
    %c0_i32 = arith.constant 0 : i32
    %0 = arith.cmpi eq, %arg2, %c0_i32 : i32
    %1 = arith.extui %0 : i1 to i32
    %c0_i32_0 = arith.constant 0 : i32
    %2 = arith.cmpi ne, %1, %c0_i32_0 : i32
    scf.if %2 {
      %cst_10 = arith.constant 0.000000e+00 : f32
      %12 = vector.broadcast %cst_10 : f32 to vector<16x128xf32>
      %c0_11 = arith.constant 0 : index
      %c0_12 = arith.constant 0 : index
      %13 = vector.load %arg7[%c0_11, %c0_12] : memref<16x128xf32, #tpu.memory_space<vmem>>, vector<16x128xf32>
      tpu.vector_store %arg7[%c0_11, %c0_12], %12 {strides = array<i32>} : memref<16x128xf32, #tpu.memory_space<vmem>>, vector<16x128xf32>,
    } else {
    }
    %c0 = arith.constant 0 : index
    %c0_1 = arith.constant 0 : index
    %3 = vector.load %arg7[%c0, %c0_1] : memref<16x128xf32, #tpu.memory_space<vmem>>, vector<16x128xf32>
    %c0_2 = arith.constant 0 : index
    %c0_3 = arith.constant 0 : index
    %4 = vector.load %arg3[%c0_2, %c0_3] : memref<16x128xf32, #tpu.memory_space<vmem>>, vector<16x128xf32>
    %c0_4 = arith.constant 0 : index
    %c0_5 = arith.constant 0 : index
    %5 = vector.load %arg4[%c0_4, %c0_5] : memref<128x128xf32, #tpu.memory_space<vmem>>, vector<128x128xf32>
    %cst = arith.constant dense<0.000000e+00> : vector<16x128xf32>
    %6 = tpu.matmul %4, %5, %cst {dimension_numbers = #tpu.dot_dimension_numbers<[1], [0], [0], [1], [0, 0, 1, 1], [], []>} : vector<16x128xf32>, vector<128x128xf32>, vector<16x128xf32> -> vector<16x128xf32>
    %7 = arith.addf %3, %6 : vector<16x128xf32>
    %c0_6 = arith.constant 0 : index
    %c0_7 = arith.constant 0 : index
    %8 = vector.load %arg7[%c0_6, %c0_7] : memref<16x128xf32, #tpu.memory_space<vmem>>, vector<16x128xf32>
    tpu.vector_store %arg7[%c0_6, %c0_7], %7 {strides = array<i32>} : memref<16x128xf32, #tpu.memory_space<vmem>>, vector<16x128xf32>,
    %c0_i32_8 = arith.constant 0 : i32
    %9 = arith.cmpi eq, %arg2, %c0_i32_8 : i32
    %10 = arith.extui %9 : i1 to i32
    %c0_i32_9 = arith.constant 0 : i32
    %11 = arith.cmpi ne, %10, %c0_i32_9 : i32
    scf.if %11 {
      %c0_10 = arith.constant 0 : index
      %c0_11 = arith.constant 0 : index
      %12 = vector.load %arg7[%c0_10, %c0_11] : memref<16x128xf32, #tpu.memory_space<vmem>>, vector<16x128xf32>
      %c0_12 = arith.constant 0 : index
      %c0_13 = arith.constant 0 : index
      %13 = vector.load %arg5[%c0_12, %c0_13] : memref<1x128xf32, #tpu.memory_space<vmem>>, vector<1x128xf32>
      %14 = vector.broadcast %13 : vector<1x128xf32> to vector<16x128xf32>
      %15 = arith.addf %12, %14 : vector<16x128xf32>
      %c0_14 = arith.constant 0 : index
      %c0_15 = arith.constant 0 : index
      %16 = vector.load %arg6[%c0_14, %c0_15] : memref<16x128xf32, #tpu.memory_space<vmem>>, vector<16x128xf32>
      tpu.vector_store %arg6[%c0_14, %c0_15], %15 {strides = array<i32>} : memref<16x128xf32, #tpu.memory_space<vmem>>, vector<16x128xf32>,
    } else {
    }
    return
  }
  func.func @transform_0(%arg0: i32, %arg1: i32, %arg2: i32) -> (i32, i32) {
    %c0_i32 = arith.constant 0 : i32
    return %arg0, %arg2 : i32, i32
  }
  func.func @transform_1(%arg0: i32, %arg1: i32, %arg2: i32) -> (i32, i32) {
    %c0_i32 = arith.constant 0 : i32
    return %arg2, %arg1 : i32, i32
  }
  func.func @transform_2(%arg0: i32, %arg1: i32, %arg2: i32) -> (i32, i32) {
    %c0_i32 = arith.constant 0 : i32
    %c0_i32_0 = arith.constant 0 : i32
    return %c0_i32, %arg1 : i32, i32
  }
  func.func @transform_3(%arg0: i32, %arg1: i32, %arg2: i32) -> (i32, i32) {
    %c0_i32 = arith.constant 0 : i32
    return %arg0, %arg1 : i32, i32
  }
}

module attributes {stable_mosaic.version = 11 : i64} {
  func.func @_matmul_bias_kernel(%arg0: i32, %arg1: i32, %arg2: i32, %arg3: memref<16x128xf32, #tpu.memory_space<vmem>>, %arg4: memref<128x128xf32, #tpu.memory_space<vmem>>, %arg5: memref<1x128xf32, #tpu.memory_space<vmem>>, %arg6: memref<16x128xf32, #tpu.memory_space<vmem>>, %arg7: memref<16x128xf32, #tpu.memory_space<vmem>>) attributes {dimension_semantics = [#tpu.dimension_semantics<parallel>, #tpu.dimension_semantics<parallel>, #tpu.dimension_semantics<arbitrary>], iteration_bounds = array<i64: 1, 1, 1>, scalar_prefetch = 0 : i64, scratch_operands = 1 : i64, tpu.core_type = #tpu.core_type<tc>, window_params = [{transform_indices = @transform_0, window_bounds = array<i64: 16, 128>}, {transform_indices = @transform_1, window_bounds = array<i64: 128, 128>}, {transform_indices = @transform_2, window_bounds = array<i64: 1, 128>}, {transform_indices = @transform_3, window_bounds = array<i64: 16, 128>}]} {
    %c0_i32 = arith.constant 0 : i32
    %0 = arith.cmpi eq, %arg2, %c0_i32 : i32
    %1 = arith.extui %0 : i1 to i32
    %c0_i32_0 = arith.constant 0 : i32
    %2 = arith.cmpi ne, %1, %c0_i32_0 : i32
    scf.if %2 {
      %cst_10 = arith.constant 0.000000e+00 : f32
      %12 = vector.broadcast %cst_10 : f32 to vector<16x128xf32>
      %c0_11 = arith.constant 0 : index
      %c0_12 = arith.constant 0 : index
      %13 = vector.load %arg7[%c0_11, %c0_12] : memref<16x128xf32, #tpu.memory_space<vmem>>, vector<16x128xf32>
      tpu.vector_store %arg7[%c0_11, %c0_12], %12 {strides = array<i32>} : memref<16x128xf32, #tpu.memory_space<vmem>>, vector<16x128xf32>,
    } else {
    }
    %c0 = arith.constant 0 : index
    %c0_1 = arith.constant 0 : index
    %3 = vector.load %arg7[%c0, %c0_1] : memref<16x128xf32, #tpu.memory_space<vmem>>, vector<16x128xf32>
    %c0_2 = arith.constant 0 : index
    %c0_3 = arith.constant 0 : index
    %4 = vector.load %arg3[%c0_2, %c0_3] : memref<16x128xf32, #tpu.memory_space<vmem>>, vector<16x128xf32>
    %c0_4 = arith.constant 0 : index
    %c0_5 = arith.constant 0 : index
    %5 = vector.load %arg4[%c0_4, %c0_5] : memref<128x128xf32, #tpu.memory_space<vmem>>, vector<128x128xf32>
    %cst = arith.constant dense<0.000000e+00> : vector<16x128xf32>
    %6 = tpu.matmul %4, %5, %cst {dimension_numbers = #tpu.dot_dimension_numbers<[1], [0], [0], [1], [0, 0, 1, 1], [], []>} : vector<16x128xf32>, vector<128x128xf32>, vector<16x128xf32> -> vector<16x128xf32>
    %7 = arith.addf %3, %6 : vector<16x128xf32>
    %c0_6 = arith.constant 0 : index
    %c0_7 = arith.constant 0 : index
    %8 = vector.load %arg7[%c0_6, %c0_7] : memref<16x128xf32, #tpu.memory_space<vmem>>, vector<16x128xf32>
    tpu.vector_store %arg7[%c0_6, %c0_7], %7 {strides = array<i32>} : memref<16x128xf32, #tpu.memory_space<vmem>>, vector<16x128xf32>,
    %c0_i32_8 = arith.constant 0 : i32
    %9 = arith.cmpi eq, %arg2, %c0_i32_8 : i32
    %10 = arith.extui %9 : i1 to i32
    %c0_i32_9 = arith.constant 0 : i32
    %11 = arith.cmpi ne, %10, %c0_i32_9 : i32
    scf.if %11 {
      %c0_10 = arith.constant 0 : index
      %c0_11 = arith.constant 0 : index
      %12 = vector.load %arg7[%c0_10, %c0_11] : memref<16x128xf32, #tpu.memory_space<vmem>>, vector<16x128xf32>
      %c0_12 = arith.constant 0 : index
      %c0_13 = arith.constant 0 : index
      %13 = vector.load %arg5[%c0_12, %c0_13] : memref<1x128xf32, #tpu.memory_space<vmem>>, vector<1x128xf32>
      %14 = vector.broadcast %13 : vector<1x128xf32> to vector<16x128xf32>
      %15 = arith.addf %12, %14 : vector<16x128xf32>
      %c0_14 = arith.constant 0 : index
      %c0_15 = arith.constant 0 : index
      %16 = vector.load %arg6[%c0_14, %c0_15] : memref<16x128xf32, #tpu.memory_space<vmem>>, vector<16x128xf32>
      tpu.vector_store %arg6[%c0_14, %c0_15], %15 {strides = array<i32>} : memref<16x128xf32, #tpu.memory_space<vmem>>, vector<16x128xf32>,
    } else {
    }
    return
  }
  func.func @transform_0(%arg0: i32, %arg1: i32, %arg2: i32) -> (i32, i32) {
    %c0_i32 = arith.constant 0 : i32
    return %arg0, %arg2 : i32, i32
  }
  func.func @transform_1(%arg0: i32, %arg1: i32, %arg2: i32) -> (i32, i32) {
    %c0_i32 = arith.constant 0 : i32
    return %arg2, %arg1 : i32, i32
  }
  func.func @transform_2(%arg0: i32, %arg1: i32, %arg2: i32) -> (i32, i32) {
    %c0_i32 = arith.constant 0 : i32
    %c0_i32_0 = arith.constant 0 : i32
    return %c0_i32, %arg1 : i32, i32
  }
  func.func @transform_3(%arg0: i32, %arg1: i32, %arg2: i32) -> (i32, i32) {
    %c0_i32 = arith.constant 0 : i32
    return %arg0, %arg1 : i32, i32
  }
}

</mosaic_0001>

<llo_original>
// kernel: self_mha_forward.4
$region0: #{self_mha_forward.4}
  #allocation0 [shape = 'u32[]', space=smem, size = 0x4, offset = 0x4, fixed_abs, tag = 'smem constant byte address 0x4 - core index']
  #allocation1 [shape = 'u32[144,128]{1,0:T(1,128)}', space=vmem, size = 0x12000, scoped, tag = 'internal scratch']
  %s0 = inlined_call_operand.vmem [shape: f32[8,8,8], index: 0, kind: input, shape index: {}]
  %s1 = inlined_call_operand.vmem [shape: f32[8,8,8], index: 1, kind: input, shape index: {}]
  %s2 = inlined_call_operand.vmem [shape: f32[8,8,8], index: 2, kind: input, shape index: {}]
  %s3 = inlined_call_operand.vmem [shape: f32[8,8,8], index: 3, kind: output, shape index: {0}]
  %s4 = inlined_call_operand.vmem [shape: f32[8,8,8], index: 4, kind: output, shape index: {1}]
  %5 = xla_tuple %s3, %s4
  %s6 = sld [smem:[#allocation0]]
  $region53: #{self_mha_forward.4} parent=0
    _
  %s8 = ssub.s32 1, %s6
  %s9 = scalar_select 0, %s8, %s6
  loop: start=0, step=1, limit=10
  $region2: #{self_mha_forward.4} parent=0 // loop_pre_header
    _
  $region3: #{self_mha_forward.4} parent=0 // loop_header
    %s11 = sphi 0, %s15
    %p12 = scmp.ge.s32.totalorder %s11, 10
    %s18 = sphi 0, %s30
    %s19 = sphi 0, %s26
    %s20 = sphi 0, %s18
    %s21 = sphi 0, %s19
    %s22 = sphi 0, %s20
    %s23 = sphi 0, %s21
    %s35 = sphi 0, %s37
    %s38 = sphi 0, %s35
    %s39 = sphi 0, %s38
    %s55 = sphi 0, %s39
    %s61 = sphi 0, %s63
    %s64 = sphi 0, %s61
    %s65 = sphi 0, %s64
    %s81 = sphi 0, %s65
    %s87 = sphi 0, %s89
    %s90 = sphi 0, %s87
    %s91 = sphi 0, %s90
    %s107 = sphi 0, %s91
    %s115 = sphi 0, %s117
    %s118 = sphi 0, %s115
    %s119 = sphi 0, %s118
    %s135 = sphi 0, %s119
    %s143 = sphi 0, %s145
    %s146 = sphi 0, %s143
    %s147 = sphi 0, %s146
    %s163 = sphi 0, %s147
  $region4: #{self_mha_forward.4} parent=0 // loop_header_branch
    %14 = sbr.rel (%p12) target = $region8
  $region5: #{self_mha_forward.4} parent=0 // loop_body
    %s16 = ssub.s32 %s11, 1
    %s17 = ssub.s32 %s11, 2
    %s24 = sadd.s32 1, %s19
    %p25 = scmp.ge.s32.totalorder %s24, 1
    %s26 = scalar_select %p25, 0, %s24
    %s27 = sadd.s32 1, %s18
    %s28 = scalar_select %p25, %s27, %s18
    %p29 = scmp.ge.s32.totalorder %s28, 8
    %s30 = scalar_select %p29, 0, %s28
    %s31 = ssub.s32 %s18, %s30
    %s32 = ssub.s32 %s19, %s26
    %s33 = sor.u32 %s31, %s32
    %p34 = scmp.eq.s32.totalorder %s33, 0
    %s36 = sadd.s32 %s35, 1
    %s37 = scalar_select %p34, %s35, %s36
    %p40 = pneg %p34
    %p41 = scmp.eq.s32.totalorder %s11, 7
    %p42 = por %p40, %p41
    %p43 = scmp.ne.s32.totalorder %s35, %s38
    %p44 = scmp.eq.s32.totalorder %s11, 0
    %p45 = por %p43, %p44
    %p46 = scmp.ne.s32.totalorder %s35, %s38
    %p47 = scmp.eq.s32.totalorder %s16, 7
    %p48 = por %p46, %p47
    %p49 = scmp.ne.s32.totalorder %s38, %s39
    %p50 = scmp.eq.s32.totalorder %s16, 0
    %p51 = por %p49, %p50
    %p52 = scmp.ne.s32.totalorder %s38, %s39
    %p53 = scmp.eq.s32.totalorder %s17, 7
    %p54 = por %p52, %p53
    %p56 = scmp.ne.s32.totalorder %s39, %s55
    %p57 = scmp.eq.s32.totalorder %s17, 0
    %p58 = por %p56, %p57
    %s59 = ssub.s32 %s18, %s30
    %p60 = scmp.eq.s32.totalorder %s59, 0
    %s62 = sadd.s32 %s61, 1
    %s63 = scalar_select %p60, %s61, %s62
    %p66 = pneg %p60
    %p67 = scmp.eq.s32.totalorder %s11, 7
    %p68 = por %p66, %p67
    %p69 = scmp.ne.s32.totalorder %s61, %s64
    %p70 = scmp.eq.s32.totalorder %s11, 0
    %p71 = por %p69, %p70
    %p72 = scmp.ne.s32.totalorder %s61, %s64
    %p73 = scmp.eq.s32.totalorder %s16, 7
    %p74 = por %p72, %p73
    %p75 = scmp.ne.s32.totalorder %s64, %s65
    %p76 = scmp.eq.s32.totalorder %s16, 0
    %p77 = por %p75, %p76
    %p78 = scmp.ne.s32.totalorder %s64, %s65
    %p79 = scmp.eq.s32.totalorder %s17, 7
    %p80 = por %p78, %p79
    %p82 = scmp.ne.s32.totalorder %s65, %s81
    %p83 = scmp.eq.s32.totalorder %s17, 0
    %p84 = por %p82, %p83
    %s85 = ssub.s32 %s18, %s30
    %p86 = scmp.eq.s32.totalorder %s85, 0
    %s88 = sadd.s32 %s87, 1
    %s89 = scalar_select %p86, %s87, %s88
    %p92 = pneg %p86
    %p93 = scmp.eq.s32.totalorder %s11, 7
    %p94 = por %p92, %p93
    %p95 = scmp.ne.s32.totalorder %s87, %s90
    %p96 = scmp.eq.s32.totalorder %s11, 0
    %p97 = por %p95, %p96
    %p98 = scmp.ne.s32.totalorder %s87, %s90
    %p99 = scmp.eq.s32.totalorder %s16, 7
    %p100 = por %p98, %p99
    %p101 = scmp.ne.s32.totalorder %s90, %s91
    %p102 = scmp.eq.s32.totalorder %s16, 0
    %p103 = por %p101, %p102
    %p104 = scmp.ne.s32.totalorder %s90, %s91
    %p105 = scmp.eq.s32.totalorder %s17, 7
    %p106 = por %p104, %p105
    %p108 = scmp.ne.s32.totalorder %s91, %s107
    %p109 = scmp.eq.s32.totalorder %s17, 0
    %p110 = por %p108, %p109
    %s111 = ssub.s32 %s18, %s30
    %s112 = ssub.s32 %s19, %s26
    %s113 = sor.u32 %s111, %s112
    %p114 = scmp.eq.s32.totalorder %s113, 0
    %s116 = sadd.s32 %s115, 1
    %s117 = scalar_select %p114, %s115, %s116
    %p120 = pneg %p114
    %p121 = scmp.eq.s32.totalorder %s11, 7
    %p122 = por %p120, %p121
    %p123 = scmp.ne.s32.totalorder %s115, %s118
    %p124 = scmp.eq.s32.totalorder %s11, 0
    %p125 = por %p123, %p124
    %p126 = scmp.ne.s32.totalorder %s115, %s118
    %p127 = scmp.eq.s32.totalorder %s16, 7
    %p128 = por %p126, %p127
    %p129 = scmp.ne.s32.totalorder %s118, %s119
    %p130 = scmp.eq.s32.totalorder %s16, 0
    %p131 = por %p129, %p130
    %p132 = scmp.ne.s32.totalorder %s118, %s119
    %p133 = scmp.eq.s32.totalorder %s17, 7
    %p134 = por %p132, %p133
    %p136 = scmp.ne.s32.totalorder %s119, %s135
    %p137 = scmp.eq.s32.totalorder %s17, 0
    %p138 = por %p136, %p137
    %s139 = ssub.s32 %s18, %s30
    %s140 = ssub.s32 %s19, %s26
    %s141 = sor.u32 %s139, %s140
    %p142 = scmp.eq.s32.totalorder %s141, 0
    %s144 = sadd.s32 %s143, 1
    %s145 = scalar_select %p142, %s143, %s144
    %p148 = pneg %p142
    %p149 = scmp.eq.s32.totalorder %s11, 7
    %p150 = por %p148, %p149
    %p151 = scmp.ne.s32.totalorder %s143, %s146
    %p152 = scmp.eq.s32.totalorder %s11, 0
    %p153 = por %p151, %p152
    %p154 = scmp.ne.s32.totalorder %s143, %s146
    %p155 = scmp.eq.s32.totalorder %s16, 7
    %p156 = por %p154, %p155
    %p157 = scmp.ne.s32.totalorder %s146, %s147
    %p158 = scmp.eq.s32.totalorder %s16, 0
    %p159 = por %p157, %p158
    %p160 = scmp.ne.s32.totalorder %s146, %s147
    %p161 = scmp.eq.s32.totalorder %s17, 7
    %p162 = por %p160, %p161
    %p164 = scmp.ne.s32.totalorder %s147, %s163
    %p165 = scmp.eq.s32.totalorder %s17, 0
    %p166 = por %p164, %p165
    %p167 = scmp.le.s32.totalorder 1, %s11
    %p168 = scmp.lt.s32.totalorder %s11, 9
    %p169 = pnand %p167, %p168
    %p170 = pneg %p169
    // Predicated region
    $region9: #{self_mha_forward.4} parent=5 // pred_check
      _
    $region10: #{self_mha_forward.4} parent=5 // pred_check_branch
      %172 = sbr.rel (%p169) target = $region12
    $region11: #{self_mha_forward.4} parent=5 // pred_region
      %s173 = ssub.s32 %s11, 1
    $region12: #{self_mha_forward.4} parent=5 // pred_fallthru
      _
    %p174 = scmp.lt.s32.totalorder %s11, 8
    // Predicated region
    $region13: #{self_mha_forward.4} parent=5 // pred_check
      %p175 = pneg %p174
    $region14: #{self_mha_forward.4} parent=5 // pred_check_branch
      %177 = sbr.rel (%p175) target = $region16
    $region15: #{self_mha_forward.4} parent=5 // pred_region
      // Predicated region
      $region17: #{self_mha_forward.4} parent=15 // pred_check
        %p178 = pneg %p45
      $region18: #{self_mha_forward.4} parent=15 // pred_check_branch
        %180 = sbr.rel (%p178) target = $region20
      $region19: #{self_mha_forward.4} parent=15 // pred_region
        %p181 = scmp.lt.s32.totalorder %s18, 7
        %s182 = scalar_select %p181, %s18, 7
        %p183 = scmp.lt.s32.totalorder %s19, 0
        %s184 = scalar_select %p183, %s19, 0
        %s185 = sadd.s32 %s184, %s182
        %s186 = smul.addr %s185, 8
        %s187 = scalar_lea.vmem %s0, %s186
      $region20: #{self_mha_forward.4} parent=15 // pred_fallthru
        _
      // Predicated region
      $region21: #{self_mha_forward.4} parent=15 // pred_check
        %p188 = pneg %p71
      $region22: #{self_mha_forward.4} parent=15 // pred_check_branch
        %190 = sbr.rel (%p188) target = $region24
      $region23: #{self_mha_forward.4} parent=15 // pred_region
        %p191 = scmp.lt.s32.totalorder %s18, 7
        %s192 = scalar_select %p191, %s18, 7
        %s193 = smul.addr %s192, 8
        %s194 = scalar_lea.vmem %s1, %s193
      $region24: #{self_mha_forward.4} parent=15 // pred_fallthru
        _
      // Predicated region
      $region25: #{self_mha_forward.4} parent=15 // pred_check
        %p195 = pneg %p97
      $region26: #{self_mha_forward.4} parent=15 // pred_check_branch
        %197 = sbr.rel (%p195) target = $region28
      $region27: #{self_mha_forward.4} parent=15 // pred_region
        %p198 = scmp.lt.s32.totalorder %s18, 7
        %s199 = scalar_select %p198, %s18, 7
        %s200 = smul.addr %s199, 8
        %s201 = scalar_lea.vmem %s2, %s200
      $region28: #{self_mha_forward.4} parent=15 // pred_fallthru
        _
    $region16: #{self_mha_forward.4} parent=5 // pred_fallthru
      _
    %p202 = scmp.le.s32.totalorder 1, %s11
    %p203 = scmp.lt.s32.totalorder %s11, 9
    %p204 = pnand %p202, %p203
    %p205 = pneg %p204
    // Predicated region
    $region29: #{self_mha_forward.4} parent=5 // pred_check
      _
    $region30: #{self_mha_forward.4} parent=5 // pred_check_branch
      %207 = sbr.rel (%p204) target = $region32
    $region31: #{self_mha_forward.4} parent=5 // pred_region
      %s208 = ssub.s32 %s11, 1
      %p209 = scmp.lt.s32.totalorder %s20, 7
      %s210 = scalar_select %p209, %s20, 7
      %p211 = scmp.lt.s32.totalorder %s21, 0
      %s212 = scalar_select %p211, %s21, 0
      %s213 = sadd.s32 %s212, %s210
      %s214 = smul.addr %s213, 8
      %s215 = scalar_lea.vmem %s0, %s214
      %p216 = pneg %p51
      %p217 = pneg %p48
      %p218 = scmp.lt.s32.totalorder %s20, 7
      %s219 = scalar_select %p218, %s20, 7
      %s220 = smul.addr %s219, 8
      %s221 = scalar_lea.vmem %s1, %s220
      %p222 = pneg %p77
      %p223 = pneg %p74
      %p224 = scmp.lt.s32.totalorder %s20, 7
      %s225 = scalar_select %p224, %s20, 7
      %s226 = smul.addr %s225, 8
      %s227 = scalar_lea.vmem %s2, %s226
      %p228 = pneg %p103
      %p229 = pneg %p100
      %p230 = pneg %p131
      %p231 = pneg %p128
      %p232 = scmp.lt.s32.totalorder %s20, 7
      %s233 = scalar_select %p232, %s20, 7
      %p234 = scmp.lt.s32.totalorder %s21, 0
      %s235 = scalar_select %p234, %s21, 0
      %s236 = sadd.s32 %s235, %s233
      %s237 = smul.addr %s236, 8
      %s238 = scalar_lea.vmem %s3, %s237
      %p239 = pneg %p159
      %p240 = pneg %p156
      %p241 = scmp.lt.s32.totalorder %s20, 7
      %s242 = scalar_select %p241, %s20, 7
      %p243 = scmp.lt.s32.totalorder %s21, 0
      %s244 = scalar_select %p243, %s21, 0
      %s245 = sadd.s32 %s244, %s242
      %s246 = smul.addr %s245, 8
      %s247 = scalar_lea.vmem %s4, %s246
      %p248 = scmp.lt.s32.totalorder %s20, 7
      %s249 = scalar_select %p248, %s20, 7
      %p250 = scmp.lt.s32.totalorder %s21, 0
      %s251 = scalar_select %p250, %s21, 0
      %s252 = sadd.s32 %s251, %s249
      %s253 = smul.addr %s252, 8
      %s254 = scalar_lea.vmem %s0, %s253
      %p255 = scmp.lt.s32.totalorder %s20, 7
      %s256 = scalar_select %p255, %s20, 7
      %s257 = smul.addr %s256, 8
      %s258 = scalar_lea.vmem %s1, %s257
      %p259 = scmp.lt.s32.totalorder %s20, 7
      %s260 = scalar_select %p259, %s20, 7
      %s261 = smul.addr %s260, 8
      %s262 = scalar_lea.vmem %s2, %s261
      %p263 = scmp.lt.s32.totalorder %s20, 7
      %s264 = scalar_select %p263, %s20, 7
      %p265 = scmp.lt.s32.totalorder %s21, 0
      %s266 = scalar_select %p265, %s21, 0
      %s267 = sadd.s32 %s266, %s264
      %s268 = smul.addr %s267, 8
      %s269 = scalar_lea.vmem %s3, %s268
      %p270 = scmp.lt.s32.totalorder %s20, 7
      %s271 = scalar_select %p270, %s20, 7
      %p272 = scmp.lt.s32.totalorder %s21, 0
      %s273 = scalar_select %p272, %s21, 0
      %s274 = sadd.s32 %s273, %s271
      %s275 = smul.addr %s274, 8
      %s276 = scalar_lea.vmem %s4, %s275
      %v277 = vld [vmem:[%s254] sm:$0xff]
      %v278 = vmul.f32 %v277, 0.35355338
      %v279 = vld [vmem:[%s258] sm:$0xff]
      %v280 = vld [vmem:[%s262] sm:$0xff]
      %vm281 = vcmask 64512
      %v283 = vsel %vm281, %v278, 0
      %v286 = vsel %vm281, %v279, 0
      %288 = vmatprep.subr.mxu0 0.0
      %289 = vmatpush1.xpose.msra.mxu0 %v286
      %290 = vmatprep.subr.mxu0 0.0
      %291 = vmatpush1.xpose.msra.mxu0 0.0
      %292 = vmatprep.subr.mxu0 0.0
      %293 = vmatpush1.xpose.msra.mxu0 0.0
      %294 = vmatprep.subr.mxu0 0.0
      %295 = vmatpush1.xpose.msra.mxu0 0.0
      %296 = vmatprep.subr.mxu0 0.0
      %297 = vmatpush1.xpose.msra.mxu0 0.0
      %298 = vmatprep.subr.mxu0 0.0
      %299 = vmatpush1.xpose.msra.mxu0 0.0
      %300 = vmatprep.subr.mxu0 0.0
      %301 = vmatpush1.xpose.msra.mxu0 0.0
      %302 = vmatprep.subr.mxu0 0.0
      %303 = vmatpush1.xpose.msra.mxu0 0.0
      %304 = vmatprep.subr.mxu0 0.0
      %305 = vmatpush1.xpose.msra.mxu0 0.0
      %306 = vmatprep.subr.mxu0 0.0
      %307 = vmatpush1.xpose.msra.mxu0 0.0
      %308 = vmatprep.subr.mxu0 0.0
      %309 = vmatpush1.xpose.msra.mxu0 0.0
      %310 = vmatprep.subr.mxu0 0.0
      %311 = vmatpush1.xpose.msra.mxu0 0.0
      %312 = vmatprep.subr.mxu0 0.0
      %313 = vmatpush1.xpose.msra.mxu0 0.0
      %314 = vmatprep.subr.mxu0 0.0
      %315 = vmatpush1.xpose.msra.mxu0 0.0
      %316 = vmatprep.subr.mxu0 0.0
      %317 = vmatpush1.xpose.msra.mxu0 0.0
      %318 = vmatprep.subr.mxu0 0.0
      %319 = vmatpush1.xpose.msra.mxu0 0.0
      %320 = vmatprep.subr.mxu0 0.0
      %321 = vmatpush1.xpose.msra.mxu0 0.0
      %322 = vmatprep.subr.mxu0 0.0
      %323 = vmatpush1.xpose.msra.mxu0 0.0
      %324 = vmatprep.subr.mxu0 0.0
      %325 = vmatpush1.xpose.msra.mxu0 0.0
      %326 = vmatprep.subr.mxu0 0.0
      %327 = vmatpush1.xpose.msra.mxu0 0.0
      %328 = vmatprep.subr.mxu0 0.0
      %329 = vmatpush1.xpose.msra.mxu0 0.0
      %330 = vmatprep.subr.mxu0 0.0
      %331 = vmatpush1.xpose.msra.mxu0 0.0
      %332 = vmatprep.subr.mxu0 0.0
      %333 = vmatpush1.xpose.msra.mxu0 0.0
      %334 = vmatprep.subr.mxu0 0.0
      %335 = vmatpush1.xpose.msra.mxu0 0.0
      %336 = vmatprep.subr.mxu0 0.0
      %337 = vmatpush1.xpose.msra.mxu0 0.0
      %338 = vmatprep.subr.mxu0 0.0
      %339 = vmatpush1.xpose.msra.mxu0 0.0
      %340 = vmatprep.subr.mxu0 0.0
      %341 = vmatpush1.xpose.msra.mxu0 0.0
      %342 = vmatprep.subr.mxu0 0.0
      %343 = vmatpush1.xpose.msra.mxu0 0.0
      %344 = vmatprep.subr.mxu0 0.0
      %345 = vmatpush1.xpose.msra.mxu0 0.0
      %346 = vmatprep.subr.mxu0 0.0
      %347 = vmatpush1.xpose.msra.mxu0 0.0
      %348 = vmatprep.subr.mxu0 0.0
      %349 = vmatpush1.xpose.msra.mxu0 0.0
      %350 = vmatprep.subr.mxu0 0.0
      %351 = vmatpush1.xpose.msra.mxu0 0.0
      %352 = vmatprep.mubr.f32.mxu0 0.0
      %353 = vmatmul.mubr.f32.gmra.mrb[0].mxu0 %v283
      %v354 = vpop.f32.mrb[0].mxu0
      %v355 = vadd.f32 0.0, %v354
      %v356 = vpop.f32.mrb[0].mxu0
      %357 = vdwg.mxu0
      %v358 = vsel %vm281, %v355, -inf
      %359 = vmax.xlane.f32.xlu0 %v358
      %v360 = vpop.xlane.xlu0 %359
      %v361 = vsub.f32 %v355, %v360
      %v362 = vmul.f32 %v361, 1.442695
      %v363 = vpow.pop %v362
      %v364 = vsel %vm281, %v363, 0.0
      %365 = vadd.xlane.f32.xlu0 %v364
      %v366 = vpop.xlane.xlu0 %365
      %v367 = vrcp.pop %v366
      %v368 = vmul.f32 %v363, %v367
      %369 = vst.msk [vmem:[%s276] sm:$0xff] %vm281, %v368
      %v371 = vsel %vm281, %v368, 0
      %373 = vmatprep.subr.mxu0 0.0
      %374 = vmatpush1.msra.mxu0 %v280
      %375 = vmatprep.subr.mxu0 0.0
      %376 = vmatpush1.msra.mxu0 0.0
      %377 = vmatprep.subr.mxu0 0.0
      %378 = vmatpush1.msra.mxu0 0.0
      %379 = vmatprep.subr.mxu0 0.0
      %380 = vmatpush1.msra.mxu0 0.0
      %381 = vmatprep.subr.mxu0 0.0
      %382 = vmatpush1.msra.mxu0 0.0
      %383 = vmatprep.subr.mxu0 0.0
      %384 = vmatpush1.msra.mxu0 0.0
      %385 = vmatprep.subr.mxu0 0.0
      %386 = vmatpush1.msra.mxu0 0.0
      %387 = vmatprep.subr.mxu0 0.0
      %388 = vmatpush1.msra.mxu0 0.0
      %389 = vmatprep.subr.mxu0 0.0
      %390 = vmatpush1.msra.mxu0 0.0
      %391 = vmatprep.subr.mxu0 0.0
      %392 = vmatpush1.msra.mxu0 0.0
      %393 = vmatprep.subr.mxu0 0.0
      %394 = vmatpush1.msra.mxu0 0.0
      %395 = vmatprep.subr.mxu0 0.0
      %396 = vmatpush1.msra.mxu0 0.0
      %397 = vmatprep.subr.mxu0 0.0
      %398 = vmatpush1.msra.mxu0 0.0
      %399 = vmatprep.subr.mxu0 0.0
      %400 = vmatpush1.msra.mxu0 0.0
      %401 = vmatprep.subr.mxu0 0.0
      %402 = vmatpush1.msra.mxu0 0.0
      %403 = vmatprep.subr.mxu0 0.0
      %404 = vmatpush1.msra.mxu0 0.0
      %405 = vmatprep.subr.mxu0 0.0
      %406 = vmatpush1.msra.mxu0 0.0
      %407 = vmatprep.subr.mxu0 0.0
      %408 = vmatpush1.msra.mxu0 0.0
      %409 = vmatprep.subr.mxu0 0.0
      %410 = vmatpush1.msra.mxu0 0.0
      %411 = vmatprep.subr.mxu0 0.0
      %412 = vmatpush1.msra.mxu0 0.0
      %413 = vmatprep.subr.mxu0 0.0
      %414 = vmatpush1.msra.mxu0 0.0
      %415 = vmatprep.subr.mxu0 0.0
      %416 = vmatpush1.msra.mxu0 0.0
      %417 = vmatprep.subr.mxu0 0.0
      %418 = vmatpush1.msra.mxu0 0.0
      %419 = vmatprep.subr.mxu0 0.0
      %420 = vmatpush1.msra.mxu0 0.0
      %421 = vmatprep.subr.mxu0 0.0
      %422 = vmatpush1.msra.mxu0 0.0
      %423 = vmatprep.subr.mxu0 0.0
      %424 = vmatpush1.msra.mxu0 0.0
      %425 = vmatprep.subr.mxu0 0.0
      %426 = vmatpush1.msra.mxu0 0.0
      %427 = vmatprep.subr.mxu0 0.0
      %428 = vmatpush1.msra.mxu0 0.0
      %429 = vmatprep.subr.mxu0 0.0
      %430 = vmatpush1.msra.mxu0 0.0
      %431 = vmatprep.subr.mxu0 0.0
      %432 = vmatpush1.msra.mxu0 0.0
      %433 = vmatprep.subr.mxu0 0.0
      %434 = vmatpush1.msra.mxu0 0.0
      %435 = vmatprep.subr.mxu0 0.0
      %436 = vmatpush1.msra.mxu0 0.0
      %437 = vmatprep.mubr.f32.mxu0 0.0
      %438 = vmatmul.mubr.f32.gmra.mrb[0].mxu0 %v371
      %v439 = vpop.f32.mrb[0].mxu0
      %v440 = vadd.f32 0.0, %v439
      %v441 = vpop.f32.mrb[0].mxu0
      %442 = vdwg.mxu0
      %443 = vst.msk [vmem:[%s269] sm:$0xff] %vm281, %v440
      %p444 = scmp.lt.s32.totalorder %s20, 7
      %s445 = scalar_select %p444, %s20, 7
      %p446 = scmp.lt.s32.totalorder %s21, 0
      %s447 = scalar_select %p446, %s21, 0
      %s448 = sadd.s32 %s447, %s445
      %s449 = smul.addr %s448, 8
      %s450 = scalar_lea.vmem %s3, %s449
      %p451 = scmp.lt.s32.totalorder %s20, 7
      %s452 = scalar_select %p451, %s20, 7
      %p453 = scmp.lt.s32.totalorder %s21, 0
      %s454 = scalar_select %p453, %s21, 0
      %s455 = sadd.s32 %s454, %s452
      %s456 = smul.addr %s455, 8
      %s457 = scalar_lea.vmem %s4, %s456
      // Predicated region
      $region33: #{self_mha_forward.4} parent=31 // pred_check
        %p458 = pneg %p128
      $region34: #{self_mha_forward.4} parent=31 // pred_check_branch
        %460 = sbr.rel (%p458) target = $region36
      $region35: #{self_mha_forward.4} parent=31 // pred_region
        _
      $region36: #{self_mha_forward.4} parent=31 // pred_fallthru
        _
      // Predicated region
      $region37: #{self_mha_forward.4} parent=31 // pred_check
        %p461 = pneg %p156
      $region38: #{self_mha_forward.4} parent=31 // pred_check_branch
        %463 = sbr.rel (%p461) target = $region40
      $region39: #{self_mha_forward.4} parent=31 // pred_region
        _
      $region40: #{self_mha_forward.4} parent=31 // pred_fallthru
        _
    $region32: #{self_mha_forward.4} parent=5 // pred_fallthru
      _
    %p464 = scmp.le.s32.totalorder 2, %s11
    // Predicated region
    $region41: #{self_mha_forward.4} parent=5 // pred_check
      %p465 = pneg %p464
    $region42: #{self_mha_forward.4} parent=5 // pred_check_branch
      %467 = sbr.rel (%p465) target = $region44
    $region43: #{self_mha_forward.4} parent=5 // pred_region
      %s468 = ssub.s32 %s11, 2
      // Predicated region
      $region45: #{self_mha_forward.4} parent=43 // pred_check
        %p469 = pneg %p134
      $region46: #{self_mha_forward.4} parent=43 // pred_check_branch
        %471 = sbr.rel (%p469) target = $region48
      $region47: #{self_mha_forward.4} parent=43 // pred_region
        %p472 = scmp.lt.s32.totalorder %s22, 7
        %s473 = scalar_select %p472, %s22, 7
        %p474 = scmp.lt.s32.totalorder %s23, 0
        %s475 = scalar_select %p474, %s23, 0
        %s476 = sadd.s32 %s475, %s473
        %s477 = smul.addr %s476, 8
        %s478 = scalar_lea.vmem %s3, %s477
      $region48: #{self_mha_forward.4} parent=43 // pred_fallthru
        _
      // Predicated region
      $region49: #{self_mha_forward.4} parent=43 // pred_check
        %p479 = pneg %p162
      $region50: #{self_mha_forward.4} parent=43 // pred_check_branch
        %481 = sbr.rel (%p479) target = $region52
      $region51: #{self_mha_forward.4} parent=43 // pred_region
        %p482 = scmp.lt.s32.totalorder %s22, 7
        %s483 = scalar_select %p482, %s22, 7
        %p484 = scmp.lt.s32.totalorder %s23, 0
        %s485 = scalar_select %p484, %s23, 0
        %s486 = sadd.s32 %s485, %s483
        %s487 = smul.addr %s486, 8
        %s488 = scalar_lea.vmem %s4, %s487
      $region52: #{self_mha_forward.4} parent=43 // pred_fallthru
        _
    $region44: #{self_mha_forward.4} parent=5 // pred_fallthru
      _
  $region6: #{self_mha_forward.4} parent=0 // loop_footer
    %s15 = sadd.s32 1, %s11
  $region7: #{self_mha_forward.4} parent=0 // loop_footer_branch
    %10 = sbr.rel target = $region3
  $region8: #{self_mha_forward.4} parent=0 // loop_exit
    _

// kernel: self_mha_forward.3
$region0: #{self_mha_forward.3}
  #allocation0 [shape = 'u32[]', space=smem, size = 0x4, offset = 0x4, fixed_abs, tag = 'smem constant byte address 0x4 - core index']
  #allocation1 [shape = 'u32[144,128]{1,0:T(1,128)}', space=vmem, size = 0x12000, scoped, tag = 'internal scratch']
  #allocation2 [shape = 'f32[16,128]{1,0:T(8,128)}', space=vmem, size = 0x2000, scoped, tag = 'scratch operand']
  %s0 = inlined_call_operand.vmem [shape: f32[16,128], index: 0, kind: input, shape index: {}]
  %s1 = inlined_call_operand.vmem [shape: f32[128,128], index: 1, kind: input, shape index: {}]
  %s2 = inlined_call_operand.vmem [shape: f32[1,128], index: 2, kind: input, shape index: {}]
  %s3 = inlined_call_operand.vmem [shape: f32[16,128], index: 3, kind: output, shape index: {}]
  %s4 = sld [smem:[#allocation0]]
  $region30: #{self_mha_forward.3} parent=0
    _
  %s6 = ssub.s32 1, %s4
  %s7 = scalar_select 0, %s6, %s4
  // Predicated region
  $region2: #{self_mha_forward.3} parent=0 // pred_check
    _
  $region3: #{self_mha_forward.3} parent=0 // pred_check_branch
    %9 = sbr.rel (0) target = $region5
  $region4: #{self_mha_forward.3} parent=0 // pred_region
    _
  $region5: #{self_mha_forward.3} parent=0 // pred_fallthru
    _
  // Predicated region
  $region6: #{self_mha_forward.3} parent=0 // pred_check
    _
  $region7: #{self_mha_forward.3} parent=0 // pred_check_branch
    %11 = sbr.rel (0) target = $region9
  $region8: #{self_mha_forward.3} parent=0 // pred_region
    _
  $region9: #{self_mha_forward.3} parent=0 // pred_fallthru
    _
  // Predicated region
  $region10: #{self_mha_forward.3} parent=0 // pred_check
    _
  $region11: #{self_mha_forward.3} parent=0 // pred_check_branch
    %13 = sbr.rel (0) target = $region13
  $region12: #{self_mha_forward.3} parent=0 // pred_region
    _
  $region13: #{self_mha_forward.3} parent=0 // pred_fallthru
    _
  %p14 = scmp.eq.s32.totalorder 0, 0
  // Predicated region
  $region14: #{self_mha_forward.3} parent=0 // pred_check
    %p15 = pneg %p14
  $region15: #{self_mha_forward.3} parent=0 // pred_check_branch
    %17 = sbr.rel (%p15) target = $region17
  $region16: #{self_mha_forward.3} parent=0 // pred_region
    %18 = vst [vmem:[#allocation2] sm:$0xff] 0.0
    %19 = vst [vmem:[#allocation2 + $0x8] sm:$0xff] 0.0
  $region17: #{self_mha_forward.3} parent=0 // pred_fallthru
    _
  %v20 = vld [vmem:[#allocation2] sm:$0xff]
  %v21 = vld [vmem:[#allocation2 + $0x8] sm:$0xff]
  %v22 = vld [vmem:[%s0] sm:$0xff]
  %v23 = vld [vmem:[%s0 + $0x8] sm:$0xff]
  %v24 = vld [vmem:[%s1] sm:$0xff]
  %v25 = vld [vmem:[%s1 + $0x8] sm:$0xff]
  %v26 = vld [vmem:[%s1 + $0x10] sm:$0xff]
  %v27 = vld [vmem:[%s1 + $0x18] sm:$0xff]
  %v28 = vld [vmem:[%s1 + $0x20] sm:$0xff]
  %v29 = vld [vmem:[%s1 + $0x28] sm:$0xff]
  %v30 = vld [vmem:[%s1 + $0x30] sm:$0xff]
  %v31 = vld [vmem:[%s1 + $0x38] sm:$0xff]
  %v32 = vld [vmem:[%s1 + $0x40] sm:$0xff]
  %v33 = vld [vmem:[%s1 + $0x48] sm:$0xff]
  %v34 = vld [vmem:[%s1 + $0x50] sm:$0xff]
  %v35 = vld [vmem:[%s1 + $0x58] sm:$0xff]
  %v36 = vld [vmem:[%s1 + $0x60] sm:$0xff]
  %v37 = vld [vmem:[%s1 + $0x68] sm:$0xff]
  %v38 = vld [vmem:[%s1 + $0x70] sm:$0xff]
  %v39 = vld [vmem:[%s1 + $0x78] sm:$0xff]
  %40 = vmatprep.subr.mxu0 0.0
  %41 = vmatpush1.msra.mxu0 %v24
  %42 = vmatprep.subr.mxu0 0.0
  %43 = vmatpush1.msra.mxu0 %v25
  %44 = vmatprep.subr.mxu0 0.0
  %45 = vmatpush1.msra.mxu0 %v26
  %46 = vmatprep.subr.mxu0 0.0
  %47 = vmatpush1.msra.mxu0 %v27
  %48 = vmatprep.subr.mxu0 0.0
  %49 = vmatpush1.msra.mxu0 %v28
  %50 = vmatprep.subr.mxu0 0.0
  %51 = vmatpush1.msra.mxu0 %v29
  %52 = vmatprep.subr.mxu0 0.0
  %53 = vmatpush1.msra.mxu0 %v30
  %54 = vmatprep.subr.mxu0 0.0
  %55 = vmatpush1.msra.mxu0 %v31
  %56 = vmatprep.subr.mxu0 0.0
  %57 = vmatpush1.msra.mxu0 %v32
  %58 = vmatprep.subr.mxu0 0.0
  %59 = vmatpush1.msra.mxu0 %v33
  %60 = vmatprep.subr.mxu0 0.0
  %61 = vmatpush1.msra.mxu0 %v34
  %62 = vmatprep.subr.mxu0 0.0
  %63 = vmatpush1.msra.mxu0 %v35
  %64 = vmatprep.subr.mxu0 0.0
  %65 = vmatpush1.msra.mxu0 %v36
  %66 = vmatprep.subr.mxu0 0.0
  %67 = vmatpush1.msra.mxu0 %v37
  %68 = vmatprep.subr.mxu0 0.0
  %69 = vmatpush1.msra.mxu0 %v38
  %70 = vmatprep.subr.mxu0 0.0
  %71 = vmatpush1.msra.mxu0 %v39
  %72 = vmatprep.subr.mxu0 0.0
  %73 = vmatpush1.msra.mxu0 0.0
  %74 = vmatprep.subr.mxu0 0.0
  %75 = vmatpush1.msra.mxu0 0.0
  %76 = vmatprep.subr.mxu0 0.0
  %77 = vmatpush1.msra.mxu0 0.0
  %78 = vmatprep.subr.mxu0 0.0
  %79 = vmatpush1.msra.mxu0 0.0
  %80 = vmatprep.subr.mxu0 0.0
  %81 = vmatpush1.msra.mxu0 0.0
  %82 = vmatprep.subr.mxu0 0.0
  %83 = vmatpush1.msra.mxu0 0.0
  %84 = vmatprep.subr.mxu0 0.0
  %85 = vmatpush1.msra.mxu0 0.0
  %86 = vmatprep.subr.mxu0 0.0
  %87 = vmatpush1.msra.mxu0 0.0
  %88 = vmatprep.subr.mxu0 0.0
  %89 = vmatpush1.msra.mxu0 0.0
  %90 = vmatprep.subr.mxu0 0.0
  %91 = vmatpush1.msra.mxu0 0.0
  %92 = vmatprep.subr.mxu0 0.0
  %93 = vmatpush1.msra.mxu0 0.0
  %94 = vmatprep.subr.mxu0 0.0
  %95 = vmatpush1.msra.mxu0 0.0
  %96 = vmatprep.subr.mxu0 0.0
  %97 = vmatpush1.msra.mxu0 0.0
  %98 = vmatprep.subr.mxu0 0.0
  %99 = vmatpush1.msra.mxu0 0.0
  %100 = vmatprep.subr.mxu0 0.0
  %101 = vmatpush1.msra.mxu0 0.0
  %102 = vmatprep.subr.mxu0 0.0
  %103 = vmatpush1.msra.mxu0 0.0
  %104 = vmatprep.mubr.f32.mxu0 0.0
  %105 = vmatmul.mubr.f32.gmra.mrb[0].mxu0 %v22
  %v106 = vpop.f32.mrb[0].mxu0
  %v107 = vadd.f32 0.0, %v106
  %v108 = vpop.f32.mrb[0].mxu0
  %109 = vmatprep.mubr.f32.mxu0 0.0
  %110 = vmatmul.mubr.f32.gmra.mrb[0].mxu0 %v23
  %v111 = vpop.f32.mrb[0].mxu0
  %v112 = vadd.f32 0.0, %v111
  %v113 = vpop.f32.mrb[0].mxu0
  %114 = vdwg.mxu0
  %v115 = vadd.f32 %v20, %v107
  %v116 = vadd.f32 %v21, %v112
  %117 = vst [vmem:[#allocation2] sm:$0xff] %v115
  %118 = vst [vmem:[#allocation2 + $0x8] sm:$0xff] %v116
  // Predicated region
  $region18: #{self_mha_forward.3} parent=0 // pred_check
    %p119 = pneg %p14
  $region19: #{self_mha_forward.3} parent=0 // pred_check_branch
    %121 = sbr.rel (%p119) target = $region21
  $region20: #{self_mha_forward.3} parent=0 // pred_region
    %v122 = vld [vmem:[#allocation2] sm:$0xff]
    %v123 = vld [vmem:[#allocation2 + $0x8] sm:$0xff]
    %v124 = vld [vmem:[%s2] sm:$0x1]
    %v126 = vlaneseq
    %v127 = vshrl.u32 %v126, 7
    %v128 = vsub.s32 0, %v127
    %v129 = vrot.slane %v124, %v128
    %v131 = vadd.f32 %v122, %v129
    %v132 = vadd.f32 %v123, %v129
    %133 = vst [vmem:[%s3] sm:$0xff] %v131
    %134 = vst [vmem:[%s3 + $0x8] sm:$0xff] %v132
  $region21: #{self_mha_forward.3} parent=0 // pred_fallthru
    _
  // Predicated region
  $region22: #{self_mha_forward.3} parent=0 // pred_check
    _
  $region23: #{self_mha_forward.3} parent=0 // pred_check_branch
    %136 = sbr.rel (0) target = $region25
  $region24: #{self_mha_forward.3} parent=0 // pred_region
    _
  $region25: #{self_mha_forward.3} parent=0 // pred_fallthru
    _
  // Predicated region
  $region26: #{self_mha_forward.3} parent=0 // pred_check
    _
  $region27: #{self_mha_forward.3} parent=0 // pred_check_branch
    %138 = sbr.rel (0) target = $region29
  $region28: #{self_mha_forward.3} parent=0 // pred_region
    _
  $region29: #{self_mha_forward.3} parent=0 // pred_fallthru
    _

// kernel: self_mha_forward.5
$region0: #{self_mha_forward.5}
  #allocation0 [shape = 'u32[]', space=smem, size = 0x4, offset = 0x4, fixed_abs, tag = 'smem constant byte address 0x4 - core index']
  #allocation1 [shape = 'u32[144,128]{1,0:T(1,128)}', space=vmem, size = 0x12000, scoped, tag = 'internal scratch']
  #allocation2 [shape = 'f32[16,128]{1,0:T(8,128)}', space=vmem, size = 0x2000, scoped, tag = 'scratch operand']
  %s0 = inlined_call_operand.vmem [shape: f32[16,128], index: 0, kind: input, shape index: {}]
  %s1 = inlined_call_operand.vmem [shape: f32[128,128], index: 1, kind: input, shape index: {}]
  %s2 = inlined_call_operand.vmem [shape: f32[1,128], index: 2, kind: input, shape index: {}]
  %s3 = inlined_call_operand.hbm [shape: f32[16,128], index: 3, kind: output, shape index: {}]
  %s4 = sld [smem:[#allocation0]]
  $region30: #{self_mha_forward.5} parent=0
    _
  %s6 = ssub.s32 1, %s4
  %s7 = scalar_select 0, %s6, %s4
  $region1: #{self_mha_forward.5} parent=0
    #allocation3 [shape = 'u8[8192]{0}', space=vmem, size = 0x2000, scoped, tag = 'output window, operand 0, single buffered']
    #allocation4 [shape = 's32[1]{0}', space=sflag, size = 0x4, scoped, tag = 'scoped memory for self_mha_forward.5']
    %8 = vsyncpa [#allocation4], 0
    // Predicated region
    $region2: #{self_mha_forward.5} parent=1 // pred_check
      _
    $region3: #{self_mha_forward.5} parent=1 // pred_check_branch
      %10 = sbr.rel (0) target = $region5
    $region4: #{self_mha_forward.5} parent=1 // pred_region
      _
    $region5: #{self_mha_forward.5} parent=1 // pred_fallthru
      _
    // Predicated region
    $region6: #{self_mha_forward.5} parent=1 // pred_check
      _
    $region7: #{self_mha_forward.5} parent=1 // pred_check_branch
      %12 = sbr.rel (0) target = $region9
    $region8: #{self_mha_forward.5} parent=1 // pred_region
      _
    $region9: #{self_mha_forward.5} parent=1 // pred_fallthru
      _
    // Predicated region
    $region10: #{self_mha_forward.5} parent=1 // pred_check
      _
    $region11: #{self_mha_forward.5} parent=1 // pred_check_branch
      %14 = sbr.rel (0) target = $region13
    $region12: #{self_mha_forward.5} parent=1 // pred_region
      _
    $region13: #{self_mha_forward.5} parent=1 // pred_fallthru
      _
    %p15 = scmp.eq.s32.totalorder 0, 0
    // Predicated region
    $region14: #{self_mha_forward.5} parent=1 // pred_check
      %p16 = pneg %p15
    $region15: #{self_mha_forward.5} parent=1 // pred_check_branch
      %18 = sbr.rel (%p16) target = $region17
    $region16: #{self_mha_forward.5} parent=1 // pred_region
      %19 = vst [vmem:[#allocation2] sm:$0xff] 0.0
      %20 = vst [vmem:[#allocation2 + $0x8] sm:$0xff] 0.0
    $region17: #{self_mha_forward.5} parent=1 // pred_fallthru
      _
    %v21 = vld [vmem:[#allocation2] sm:$0xff]
    %v22 = vld [vmem:[#allocation2 + $0x8] sm:$0xff]
    %v23 = vld [vmem:[%s0] sm:$0xff]
    %v24 = vld [vmem:[%s0 + $0x8] sm:$0xff]
    %v25 = vld [vmem:[%s1] sm:$0xff]
    %v26 = vld [vmem:[%s1 + $0x8] sm:$0xff]
    %v27 = vld [vmem:[%s1 + $0x10] sm:$0xff]
    %v28 = vld [vmem:[%s1 + $0x18] sm:$0xff]
    %v29 = vld [vmem:[%s1 + $0x20] sm:$0xff]
    %v30 = vld [vmem:[%s1 + $0x28] sm:$0xff]
    %v31 = vld [vmem:[%s1 + $0x30] sm:$0xff]
    %v32 = vld [vmem:[%s1 + $0x38] sm:$0xff]
    %v33 = vld [vmem:[%s1 + $0x40] sm:$0xff]
    %v34 = vld [vmem:[%s1 + $0x48] sm:$0xff]
    %v35 = vld [vmem:[%s1 + $0x50] sm:$0xff]
    %v36 = vld [vmem:[%s1 + $0x58] sm:$0xff]
    %v37 = vld [vmem:[%s1 + $0x60] sm:$0xff]
    %v38 = vld [vmem:[%s1 + $0x68] sm:$0xff]
    %v39 = vld [vmem:[%s1 + $0x70] sm:$0xff]
    %v40 = vld [vmem:[%s1 + $0x78] sm:$0xff]
    %41 = vmatprep.subr.mxu0 0.0
    %42 = vmatpush1.msra.mxu0 %v25
    %43 = vmatprep.subr.mxu0 0.0
    %44 = vmatpush1.msra.mxu0 %v26
    %45 = vmatprep.subr.mxu0 0.0
    %46 = vmatpush1.msra.mxu0 %v27
    %47 = vmatprep.subr.mxu0 0.0
    %48 = vmatpush1.msra.mxu0 %v28
    %49 = vmatprep.subr.mxu0 0.0
    %50 = vmatpush1.msra.mxu0 %v29
    %51 = vmatprep.subr.mxu0 0.0
    %52 = vmatpush1.msra.mxu0 %v30
    %53 = vmatprep.subr.mxu0 0.0
    %54 = vmatpush1.msra.mxu0 %v31
    %55 = vmatprep.subr.mxu0 0.0
    %56 = vmatpush1.msra.mxu0 %v32
    %57 = vmatprep.subr.mxu0 0.0
    %58 = vmatpush1.msra.mxu0 %v33
    %59 = vmatprep.subr.mxu0 0.0
    %60 = vmatpush1.msra.mxu0 %v34
    %61 = vmatprep.subr.mxu0 0.0
    %62 = vmatpush1.msra.mxu0 %v35
    %63 = vmatprep.subr.mxu0 0.0
    %64 = vmatpush1.msra.mxu0 %v36
    %65 = vmatprep.subr.mxu0 0.0
    %66 = vmatpush1.msra.mxu0 %v37
    %67 = vmatprep.subr.mxu0 0.0
    %68 = vmatpush1.msra.mxu0 %v38
    %69 = vmatprep.subr.mxu0 0.0
    %70 = vmatpush1.msra.mxu0 %v39
    %71 = vmatprep.subr.mxu0 0.0
    %72 = vmatpush1.msra.mxu0 %v40
    %73 = vmatprep.subr.mxu0 0.0
    %74 = vmatpush1.msra.mxu0 0.0
    %75 = vmatprep.subr.mxu0 0.0
    %76 = vmatpush1.msra.mxu0 0.0
    %77 = vmatprep.subr.mxu0 0.0
    %78 = vmatpush1.msra.mxu0 0.0
    %79 = vmatprep.subr.mxu0 0.0
    %80 = vmatpush1.msra.mxu0 0.0
    %81 = vmatprep.subr.mxu0 0.0
    %82 = vmatpush1.msra.mxu0 0.0
    %83 = vmatprep.subr.mxu0 0.0
    %84 = vmatpush1.msra.mxu0 0.0
    %85 = vmatprep.subr.mxu0 0.0
    %86 = vmatpush1.msra.mxu0 0.0
    %87 = vmatprep.subr.mxu0 0.0
    %88 = vmatpush1.msra.mxu0 0.0
    %89 = vmatprep.subr.mxu0 0.0
    %90 = vmatpush1.msra.mxu0 0.0
    %91 = vmatprep.subr.mxu0 0.0
    %92 = vmatpush1.msra.mxu0 0.0
    %93 = vmatprep.subr.mxu0 0.0
    %94 = vmatpush1.msra.mxu0 0.0
    %95 = vmatprep.subr.mxu0 0.0
    %96 = vmatpush1.msra.mxu0 0.0
    %97 = vmatprep.subr.mxu0 0.0
    %98 = vmatpush1.msra.mxu0 0.0
    %99 = vmatprep.subr.mxu0 0.0
    %100 = vmatpush1.msra.mxu0 0.0
    %101 = vmatprep.subr.mxu0 0.0
    %102 = vmatpush1.msra.mxu0 0.0
    %103 = vmatprep.subr.mxu0 0.0
    %104 = vmatpush1.msra.mxu0 0.0
    %105 = vmatprep.mubr.f32.mxu0 0.0
    %106 = vmatmul.mubr.f32.gmra.mrb[0].mxu0 %v23
    %v107 = vpop.f32.mrb[0].mxu0
    %v108 = vadd.f32 0.0, %v107
    %v109 = vpop.f32.mrb[0].mxu0
    %110 = vmatprep.mubr.f32.mxu0 0.0
    %111 = vmatmul.mubr.f32.gmra.mrb[0].mxu0 %v24
    %v112 = vpop.f32.mrb[0].mxu0
    %v113 = vadd.f32 0.0, %v112
    %v114 = vpop.f32.mrb[0].mxu0
    %115 = vdwg.mxu0
    %v116 = vadd.f32 %v21, %v108
    %v117 = vadd.f32 %v22, %v113
    %118 = vst [vmem:[#allocation2] sm:$0xff] %v116
    %119 = vst [vmem:[#allocation2 + $0x8] sm:$0xff] %v117
    // Predicated region
    $region18: #{self_mha_forward.5} parent=1 // pred_check
      %p120 = pneg %p15
    $region19: #{self_mha_forward.5} parent=1 // pred_check_branch
      %122 = sbr.rel (%p120) target = $region21
    $region20: #{self_mha_forward.5} parent=1 // pred_region
      %v123 = vld [vmem:[#allocation2] sm:$0xff]
      %v124 = vld [vmem:[#allocation2 + $0x8] sm:$0xff]
      %v125 = vld [vmem:[%s2] sm:$0x1]
      %v127 = vlaneseq
      %v128 = vshrl.u32 %v127, 7
      %v129 = vsub.s32 0, %v128
      %v130 = vrot.slane %v125, %v129
      %v132 = vadd.f32 %v123, %v130
      %v133 = vadd.f32 %v124, %v130
      %134 = vst [vmem:[#allocation3] sm:$0xff] %v132
      %135 = vst [vmem:[#allocation3 + $0x8] sm:$0xff] %v133
    $region21: #{self_mha_forward.5} parent=1 // pred_fallthru
      _
    // Predicated region
    $region22: #{self_mha_forward.5} parent=1 // pred_check
      _
    $region23: #{self_mha_forward.5} parent=1 // pred_check_branch
      %137 = sbr.rel (0) target = $region25
    $region24: #{self_mha_forward.5} parent=1 // pred_region
      %s139 = ssub.s32 256, 256
      %140 = vsyncadd [#allocation4], %s139
      %s141 = sshll.u32 [#allocation3], 4
      %s142 = int_to_ptr.vmem [resolvable:$true] %s141
      %147 = dma.vmem_to_hbm [thread:$0]  %s142, 256, %s3, [#allocation4], 128, 128, 8
    $region25: #{self_mha_forward.5} parent=1 // pred_fallthru
      _
    // Predicated region
    $region26: #{self_mha_forward.5} parent=1 // pred_check
      _
    $region27: #{self_mha_forward.5} parent=1 // pred_check_branch
      %149 = sbr.rel (0) target = $region29
    $region28: #{self_mha_forward.5} parent=1 // pred_region
      %150 = dma.done [#allocation4], 256
    $region29: #{self_mha_forward.5} parent=1 // pred_fallthru
      _
    %151 = vsyncpa [#allocation4], 1

</llo_original>
